<compile_context>
chip_gen: v7x
topology: tpu7x:2x2x1
jax: 0.10.0
libtpu: 0.0.40
codegen_flags: <defaults>
</compile_context>

<pallas_src>
from functools import partial

import jax
import jax.numpy as jnp
import numpy as np
from jax.experimental import pallas as pl
from jax.experimental.pallas import tpu as pltpu

D_IN, H1, H2, D_OUT = 28 * 28, 256, 128, 10
D_OUT_PAD = 128   # lane-dense output stores; real 10 logits sliced out under the same jit
ALPHA = 0.01


def _leaky_relu(x, alpha=ALPHA):
    return jnp.where(x > 0, x, alpha * x)


def mlp_kernel(x_ref, w1_ref, b1_ref, w2_ref, b2_ref, w3_ref, b3_ref, o_ref):
    # All three layers fused per batch tile: bf16 operands on the MXU with f32
    # accumulation; bias add + LeakyReLU stay in f32 on the VPU.
    x = x_ref[...].astype(jnp.bfloat16)                                        # (TB, 784)
    h1 = jnp.dot(x, w1_ref[...], preferred_element_type=jnp.float32) + b1_ref[...]
    h1 = _leaky_relu(h1).astype(jnp.bfloat16)                                  # (TB, 256)
    h2 = jnp.dot(h1, w2_ref[...], preferred_element_type=jnp.float32) + b2_ref[...]
    h2 = _leaky_relu(h2).astype(jnp.bfloat16)                                  # (TB, 128)
    h3 = jnp.dot(h2, w3_ref[...], preferred_element_type=jnp.float32) + b3_ref[...]
    o_ref[...] = h3.astype(o_ref.dtype)                                        # (TB, 128) bf16


def _round_up(n, m):
    return (n + m - 1) // m * m


def _choose_tb(batch, tb_max=2048):
    """Batch tile: multiple of 16, large enough to amortize per-step overhead,
    even grid length (>= 2) for v7x megacore when the batch allows it, and small
    enough that edge-block waste stays bounded for awkward batch sizes."""
    b16 = _round_up(batch, 16)
    if b16 < 512:
        return b16                       # single step; splitting tiny batches only adds overhead
    n_steps = max(2, -(-b16 // tb_max))  # ceil division
    if n_steps % 2:
        n_steps += 1                     # even step count -> both v7x TensorCores stay busy
    return _round_up(-(-b16 // n_steps), 16)


def prepare_params(params):
    """One-time weight prep (hoisted out of the forward pass): transpose to (in, out),
    cast to bf16, pad the last layer's output columns 10 -> 128 with zeros."""
    (w1, b1), (w2, b2), (w3, b3) = params
    w1t = jnp.asarray(w1).T.astype(jnp.bfloat16)                               # (784, 256)
    w2t = jnp.asarray(w2).T.astype(jnp.bfloat16)                               # (256, 128)
    w3t = jnp.zeros((H2, D_OUT_PAD), jnp.bfloat16).at[:, :D_OUT].set(
        jnp.asarray(w3).T.astype(jnp.bfloat16))                                # (128, 128)
    b1r = jnp.asarray(b1).reshape(1, H1).astype(jnp.float32)
    b2r = jnp.asarray(b2).reshape(1, H2).astype(jnp.float32)
    b3r = jnp.zeros((1, D_OUT_PAD), jnp.float32).at[:, :D_OUT].set(
        jnp.asarray(b3).astype(jnp.float32))
    return (w1t, b1r, w2t, b2r, w3t, b3r)


@partial(jax.jit, static_argnames=("tb_max",))
def mlp_forward(x_nchw, prepared, tb_max=2048):
    """x_nchw: (B, 1, 28, 28) float32.  Returns (B, 10) float32 logits."""
    w1t, b1r, w2t, b2r, w3t, b3r = prepared
    B = x_nchw.shape[0]
    x2d = x_nchw.reshape(B, D_IN)        # free reshape under jit; stays f32 in HBM

    TB = _choose_tb(B, tb_max)
    grid = (pl.cdiv(B, TB),)             # edge block (if any) is DMA-clipped by Mosaic

    # Weights/biases: constant block index across the grid -> stay VMEM-resident.
    resident = lambda shape: pl.BlockSpec(shape, lambda i: (0, 0))

    out = pl.pallas_call(
        mlp_kernel,
        out_shape=jax.ShapeDtypeStruct((B, D_OUT_PAD), jnp.bfloat16),
        grid=grid,
        in_specs=[
            pl.BlockSpec((TB, D_IN), lambda i: (i, 0)),   # x: pipelined over batch tiles
            resident((D_IN, H1)), resident((1, H1)),
            resident((H1, H2)),   resident((1, H2)),
            resident((H2, D_OUT_PAD)), resident((1, D_OUT_PAD)),
        ],
        out_specs=pl.BlockSpec((TB, D_OUT_PAD), lambda i: (i, 0)),
        compiler_params=pltpu.CompilerParams(
            dimension_semantics=("parallel",),   # megacore sharding of batch tiles (v7x)
            vmem_limit_bytes=48 << 20,           # TB=2048 peak ~24 MiB; < 64 MiB v7x physical
        ),
    )(x2d, w1t, b1r, w2t, b2r, w3t, b3r)

    # Slice the 10 real logits and return f32 (fuses under this jit).
    return out[:, :D_OUT].astype(jnp.float32)


def init_params(key):
    """Deterministic init mimicking torch.nn.Linear default (U[-1/sqrt(fan_in), +1/sqrt(fan_in)])."""
    dims = [(H1, D_IN), (H2, H1), (D_OUT, H2)]
    params = []
    for out_d, in_d in dims:
        k_w, k_b, key = jax.random.split(key, 3)
        bound = 1.0 / np.sqrt(in_d)
        w = jax.random.uniform(k_w, (out_d, in_d), jnp.float32, -bound, bound)
        b = jax.random.uniform(k_b, (out_d,), jnp.float32, -bound, bound)
        params.append((w, b))
    return params


def mlp_reference(x_nchw, params):
    (w1, b1), (w2, b2), (w3, b3) = params
    x = x_nchw.reshape(x_nchw.shape[0], -1)
    h = x @ w1.T + b1
    h = jnp.where(h > 0, h, ALPHA * h)
    h = h @ w2.T + b2
    h = jnp.where(h > 0, h, ALPHA * h)
    return h @ w3.T + b3


if __name__ == "__main__":
    key = jax.random.PRNGKey(0)
    k_x, k_p = jax.random.split(key)

    B = 8
    x = jax.random.normal(k_x, (B, 1, 28, 28), jnp.float32)  # NCHW like PyTorch
    params = init_params(k_p)
    prepared = prepare_params(params)    # weight prep hoisted: done once, reused per call

    out = mlp_forward(x, prepared)
    out = jax.block_until_ready(out)

    ref = mlp_reference(x, params)       # f32 reference
    assert out.shape == (B, 10), out.shape
    # Tolerance relaxed vs. the f32 reference: kernel runs bf16 MXU matmuls (f32 accumulation)
    # and stores bf16 logits; observed error is well within these bounds.
    np.testing.assert_allclose(np.asarray(out), np.asarray(ref), rtol=2e-2, atol=5e-2)

    print("KERNEL_OK")
</pallas_src>

<mosaic_0001>
module attributes {stable_mosaic.version = 11 : i64} {
  func.func @mlp_kernel(%arg0: i32, %arg1: memref<16x784xf32, #tpu.memory_space<vmem>>, %arg2: memref<784x256xbf16, #tpu.memory_space<vmem>>, %arg3: memref<1x256xf32, #tpu.memory_space<vmem>>, %arg4: memref<256x128xbf16, #tpu.memory_space<vmem>>, %arg5: memref<1x128xf32, #tpu.memory_space<vmem>>, %arg6: memref<128x128xbf16, #tpu.memory_space<vmem>>, %arg7: memref<1x128xf32, #tpu.memory_space<vmem>>, %arg8: memref<16x128xbf16, #tpu.memory_space<vmem>>) attributes {dimension_semantics = [#tpu.dimension_semantics<parallel>], iteration_bounds = array<i64: 1>, scalar_prefetch = 0 : i64, scratch_operands = 0 : i64, tpu.core_type = #tpu.core_type<tc>, window_params = [{transform_indices = @transform_0, window_bounds = array<i64: 16, 784>}, {pipeline_mode = #tpu.pipeline_mode<synchronous>, transform_indices = @transform_1, window_bounds = array<i64: 784, 256>}, {pipeline_mode = #tpu.pipeline_mode<synchronous>, transform_indices = @transform_2, window_bounds = array<i64: 1, 256>}, {pipeline_mode = #tpu.pipeline_mode<synchronous>, transform_indices = @transform_3, window_bounds = array<i64: 256, 128>}, {pipeline_mode = #tpu.pipeline_mode<synchronous>, transform_indices = @transform_4, window_bounds = array<i64: 1, 128>}, {pipeline_mode = #tpu.pipeline_mode<synchronous>, transform_indices = @transform_5, window_bounds = array<i64: 128, 128>}, {pipeline_mode = #tpu.pipeline_mode<synchronous>, transform_indices = @transform_6, window_bounds = array<i64: 1, 128>}, {transform_indices = @transform_7, window_bounds = array<i64: 16, 128>}]} {
    %c0 = arith.constant 0 : index
    %c0_0 = arith.constant 0 : index
    %0 = vector.load %arg1[%c0, %c0_0] : memref<16x784xf32, #tpu.memory_space<vmem>>, vector<16x784xf32>
    %1 = arith.truncf %0 : vector<16x784xf32> to vector<16x784xbf16>
    %c0_1 = arith.constant 0 : index
    %c0_2 = arith.constant 0 : index
    %2 = vector.load %arg2[%c0_1, %c0_2] : memref<784x256xbf16, #tpu.memory_space<vmem>>, vector<784x256xbf16>
    %cst = arith.constant dense<0.000000e+00> : vector<16x256xf32>
    %3 = tpu.matmul %1, %2, %cst {dimension_numbers = #tpu.dot_dimension_numbers<[1], [0], [0], [1], [0, 0, 1, 1], [], []>} : vector<16x784xbf16>, vector<784x256xbf16>, vector<16x256xf32> -> vector<16x256xf32>
    %c0_3 = arith.constant 0 : index
    %c0_4 = arith.constant 0 : index
    %4 = vector.load %arg3[%c0_3, %c0_4] : memref<1x256xf32, #tpu.memory_space<vmem>>, vector<1x256xf32>
    %5 = vector.broadcast %4 : vector<1x256xf32> to vector<16x256xf32>
    %6 = arith.addf %3, %5 : vector<16x256xf32>
    %cst_5 = arith.constant 0.000000e+00 : f32
    %7 = vector.broadcast %cst_5 : f32 to vector<16x256xf32>
    %8 = arith.cmpf ogt, %6, %7 : vector<16x256xf32>
    %cst_6 = arith.constant 0.00999999977 : f32
    %9 = vector.broadcast %cst_6 : f32 to vector<16x256xf32>
    %10 = arith.mulf %9, %6 : vector<16x256xf32>
    %11 = arith.select %8, %6, %10 : vector<16x256xi1>, vector<16x256xf32>
    %12 = arith.truncf %11 : vector<16x256xf32> to vector<16x256xbf16>
    %c0_7 = arith.constant 0 : index
    %c0_8 = arith.constant 0 : index
    %13 = vector.load %arg4[%c0_7, %c0_8] : memref<256x128xbf16, #tpu.memory_space<vmem>>, vector<256x128xbf16>
    %cst_9 = arith.constant dense<0.000000e+00> : vector<16x128xf32>
    %14 = tpu.matmul %12, %13, %cst_9 {dimension_numbers = #tpu.dot_dimension_numbers<[1], [0], [0], [1], [0, 0, 1, 1], [], []>} : vector<16x256xbf16>, vector<256x128xbf16>, vector<16x128xf32> -> vector<16x128xf32>
    %c0_10 = arith.constant 0 : index
    %c0_11 = arith.constant 0 : index
    %15 = vector.load %arg5[%c0_10, %c0_11] : memref<1x128xf32, #tpu.memory_space<vmem>>, vector<1x128xf32>
    %16 = vector.broadcast %15 : vector<1x128xf32> to vector<16x128xf32>
    %17 = arith.addf %14, %16 : vector<16x128xf32>
    %cst_12 = arith.constant 0.000000e+00 : f32
    %18 = vector.broadcast %cst_12 : f32 to vector<16x128xf32>
    %19 = arith.cmpf ogt, %17, %18 : vector<16x128xf32>
    %cst_13 = arith.constant 0.00999999977 : f32
    %20 = vector.broadcast %cst_13 : f32 to vector<16x128xf32>
    %21 = arith.mulf %20, %17 : vector<16x128xf32>
    %22 = arith.select %19, %17, %21 : vector<16x128xi1>, vector<16x128xf32>
    %23 = arith.truncf %22 : vector<16x128xf32> to vector<16x128xbf16>
    %c0_14 = arith.constant 0 : index
    %c0_15 = arith.constant 0 : index
    %24 = vector.load %arg6[%c0_14, %c0_15] : memref<128x128xbf16, #tpu.memory_space<vmem>>, vector<128x128xbf16>
    %cst_16 = arith.constant dense<0.000000e+00> : vector<16x128xf32>
    %25 = tpu.matmul %23, %24, %cst_16 {dimension_numbers = #tpu.dot_dimension_numbers<[1], [0], [0], [1], [0, 0, 1, 1], [], []>} : vector<16x128xbf16>, vector<128x128xbf16>, vector<16x128xf32> -> vector<16x128xf32>
    %c0_17 = arith.constant 0 : index
    %c0_18 = arith.constant 0 : index
    %26 = vector.load %arg7[%c0_17, %c0_18] : memref<1x128xf32, #tpu.memory_space<vmem>>, vector<1x128xf32>
    %27 = vector.broadcast %26 : vector<1x128xf32> to vector<16x128xf32>
    %28 = arith.addf %25, %27 : vector<16x128xf32>
    %29 = arith.truncf %28 : vector<16x128xf32> to vector<16x128xbf16>
    %c0_19 = arith.constant 0 : index
    %c0_20 = arith.constant 0 : index
    %30 = vector.load %arg8[%c0_19, %c0_20] : memref<16x128xbf16, #tpu.memory_space<vmem>>, vector<16x128xbf16>
    tpu.vector_store %arg8[%c0_19, %c0_20], %29 {strides = array<i32>} : memref<16x128xbf16, #tpu.memory_space<vmem>>, vector<16x128xbf16>,
    return
  }
  func.func @transform_0(%arg0: i32) -> (i32, i32) {
    %c0_i32 = arith.constant 0 : i32
    %c0_i32_0 = arith.constant 0 : i32
    return %arg0, %c0_i32 : i32, i32
  }
  func.func @transform_1(%arg0: i32) -> (i32, i32) {
    %c0_i32 = arith.constant 0 : i32
    %c0_i32_0 = arith.constant 0 : i32
    %c0_i32_1 = arith.constant 0 : i32
    return %c0_i32, %c0_i32_0 : i32, i32
  }
  func.func @transform_2(%arg0: i32) -> (i32, i32) {
    %c0_i32 = arith.constant 0 : i32
    %c0_i32_0 = arith.constant 0 : i32
    %c0_i32_1 = arith.constant 0 : i32
    return %c0_i32, %c0_i32_0 : i32, i32
  }
  func.func @transform_3(%arg0: i32) -> (i32, i32) {
    %c0_i32 = arith.constant 0 : i32
    %c0_i32_0 = arith.constant 0 : i32
    %c0_i32_1 = arith.constant 0 : i32
    return %c0_i32, %c0_i32_0 : i32, i32
  }
  func.func @transform_4(%arg0: i32) -> (i32, i32) {
    %c0_i32 = arith.constant 0 : i32
    %c0_i32_0 = arith.constant 0 : i32
    %c0_i32_1 = arith.constant 0 : i32
    return %c0_i32, %c0_i32_0 : i32, i32
  }
  func.func @transform_5(%arg0: i32) -> (i32, i32) {
    %c0_i32 = arith.constant 0 : i32
    %c0_i32_0 = arith.constant 0 : i32
    %c0_i32_1 = arith.constant 0 : i32
    return %c0_i32, %c0_i32_0 : i32, i32
  }
  func.func @transform_6(%arg0: i32) -> (i32, i32) {
    %c0_i32 = arith.constant 0 : i32
    %c0_i32_0 = arith.constant 0 : i32
    %c0_i32_1 = arith.constant 0 : i32
    return %c0_i32, %c0_i32_0 : i32, i32
  }
  func.func @transform_7(%arg0: i32) -> (i32, i32) {
    %c0_i32 = arith.constant 0 : i32
    %c0_i32_0 = arith.constant 0 : i32
    return %arg0, %c0_i32 : i32, i32
  }
}

</mosaic_0001>

<llo_original>
// kernel: mlp_forward.1
$region0: #{mlp_forward.1}
  #allocation0 [shape = 'u32[]', space=smem, size = 0x4, offset = 0x4, fixed_abs, tag = 'smem constant byte address 0x4 - core index']
  #allocation1 [shape = 'u32[144,128]{1,0:T(1,128)}', space=vmem, size = 0x12000, scoped, tag = 'internal scratch']
  %s0 = inlined_call_operand.vmem [shape: f32[8,784], index: 0, kind: input, shape index: {}]
  %s1 = inlined_call_operand.vmem [shape: bf16[784,256], index: 1, kind: input, shape index: {}]
  %s2 = inlined_call_operand.vmem [shape: f32[1,256], index: 2, kind: input, shape index: {}]
  %s3 = inlined_call_operand.hbm [shape: bf16[256,128], index: 3, kind: input, shape index: {}]
  %s4 = inlined_call_operand.vmem [shape: f32[1,128], index: 4, kind: input, shape index: {}]
  %s5 = inlined_call_operand.hbm [shape: bf16[128,128], index: 5, kind: input, shape index: {}]
  %s6 = inlined_call_operand.vmem [shape: f32[1,128], index: 6, kind: input, shape index: {}]
  %s7 = inlined_call_operand.vmem [shape: bf16[8,128], index: 7, kind: output, shape index: {}]
  %s8 = sld [smem:[#allocation0]]
  $region76: #{mlp_forward.1} parent=0
    _
  %s10 = ssub.s32 1, %s8
  %s11 = scalar_select 0, %s10, %s8
  $region1: #{mlp_forward.1} parent=0
    #allocation2 [shape = 'u8[65536]{0}', space=vmem, size = 0x10000, scoped, tag = 'input window, operand 3, single buffered']
    #allocation3 [shape = 's32[1]{0}', space=sflag, size = 0x4, scoped, tag = 'scoped memory for mlp_forward.1']
    #allocation4 [shape = 'u8[32768]{0}', space=vmem, size = 0x8000, scoped, tag = 'input window, operand 5, single buffered']
    #allocation5 [shape = 's32[1]{0}', space=sflag, size = 0x4, scoped, tag = 'scoped memory for mlp_forward.1']
    #allocation6 [shape = 'u8[4096]{0}', space=vmem, size = 0x1000, scoped, tag = 'output window, operand 0, single buffered']
    %12 = vsyncpa [#allocation3], 0
    %13 = vsyncpa [#allocation5], 0
    // Predicated region
    $region2: #{mlp_forward.1} parent=1 // pred_check
      _
    $region3: #{mlp_forward.1} parent=1 // pred_check_branch
      %15 = sbr.rel (0) target = $region5
    $region4: #{mlp_forward.1} parent=1 // pred_region
      _
    $region5: #{mlp_forward.1} parent=1 // pred_fallthru
      _
    // Predicated region
    $region6: #{mlp_forward.1} parent=1 // pred_check
      _
    $region7: #{mlp_forward.1} parent=1 // pred_check_branch
      %17 = sbr.rel (0) target = $region9
    $region8: #{mlp_forward.1} parent=1 // pred_region
      _
    $region9: #{mlp_forward.1} parent=1 // pred_fallthru
      _
    // Predicated region
    $region10: #{mlp_forward.1} parent=1 // pred_check
      _
    $region11: #{mlp_forward.1} parent=1 // pred_check_branch
      %19 = sbr.rel (0) target = $region13
    $region12: #{mlp_forward.1} parent=1 // pred_region
      _
    $region13: #{mlp_forward.1} parent=1 // pred_fallthru
      _
    // Predicated region
    $region14: #{mlp_forward.1} parent=1 // pred_check
      _
    $region15: #{mlp_forward.1} parent=1 // pred_check_branch
      %21 = sbr.rel (0) target = $region17
    $region16: #{mlp_forward.1} parent=1 // pred_region
      %s23 = ssub.s32 2048, 2048
      %24 = vsyncadd [#allocation3], %s23
      %s25 = sshll.u32 [#allocation2], 4
      %s26 = int_to_ptr.vmem [resolvable:$true] %s25
      %31 = dma.hbm_to_vmem [thread:$0]  %s3, 2048, %s26, [#allocation3], 64, 64, 4
    $region17: #{mlp_forward.1} parent=1 // pred_fallthru
      _
    // Predicated region
    $region18: #{mlp_forward.1} parent=1 // pred_check
      _
    $region19: #{mlp_forward.1} parent=1 // pred_check_branch
      %33 = sbr.rel (0) target = $region21
    $region20: #{mlp_forward.1} parent=1 // pred_region
      _
    $region21: #{mlp_forward.1} parent=1 // pred_fallthru
      _
    // Predicated region
    $region22: #{mlp_forward.1} parent=1 // pred_check
      _
    $region23: #{mlp_forward.1} parent=1 // pred_check_branch
      %35 = sbr.rel (0) target = $region25
    $region24: #{mlp_forward.1} parent=1 // pred_region
      %s37 = ssub.s32 1024, 1024
      %38 = vsyncadd [#allocation5], %s37
      %s39 = sshll.u32 [#allocation4], 4
      %s40 = int_to_ptr.vmem [resolvable:$true] %s39
      %45 = dma.hbm_to_vmem [thread:$0]  %s5, 1024, %s40, [#allocation5], 64, 64, 4
    $region25: #{mlp_forward.1} parent=1 // pred_fallthru
      _
    // Predicated region
    $region26: #{mlp_forward.1} parent=1 // pred_check
      _
    $region27: #{mlp_forward.1} parent=1 // pred_check_branch
      %47 = sbr.rel (0) target = $region29
    $region28: #{mlp_forward.1} parent=1 // pred_region
      _
    $region29: #{mlp_forward.1} parent=1 // pred_fallthru
      _
    // Predicated region
    $region30: #{mlp_forward.1} parent=1 // pred_check
      _
    $region31: #{mlp_forward.1} parent=1 // pred_check_branch
      %49 = sbr.rel (0) target = $region33
    $region32: #{mlp_forward.1} parent=1 // pred_region
      %50 = dma.done [#allocation3], 2048
    $region33: #{mlp_forward.1} parent=1 // pred_fallthru
      _
    // Predicated region
    $region34: #{mlp_forward.1} parent=1 // pred_check
      _
    $region35: #{mlp_forward.1} parent=1 // pred_check_branch
      %52 = sbr.rel (0) target = $region37
    $region36: #{mlp_forward.1} parent=1 // pred_region
      %53 = dma.done [#allocation5], 1024
    $region37: #{mlp_forward.1} parent=1 // pred_fallthru
      _
    %v55 = vld [vmem:[%s0] sm:$0xff]
    %v56 = vld [vmem:[%s0 + $0x8] sm:$0xff]
    %v57 = vld [vmem:[%s0 + $0x10] sm:$0xff]
    %v58 = vld [vmem:[%s0 + $0x18] sm:$0xff]
    %v59 = vld [vmem:[%s0 + $0x20] sm:$0xff]
    %v60 = vld [vmem:[%s0 + $0x28] sm:$0xff]
    %v61 = vld [vmem:[%s0 + $0x30] sm:$0xff]
    %v62 = vld [vmem:[%s0 + $0x38] sm:$0xff]
    %v63 = vld [vmem:[%s0 + $0x40] sm:$0xff]
    %v64 = vld [vmem:[%s0 + $0x48] sm:$0xff]
    %v65 = vld [vmem:[%s0 + $0x50] sm:$0xff]
    %v66 = vld [vmem:[%s0 + $0x58] sm:$0xff]
    %v67 = vld [vmem:[%s0 + $0x60] sm:$0xff]
    %v68 = vld [vmem:[%s0 + $0x68] sm:$0xff]
    %v69 = vpack.c.bf16 %v62, %v55
    %v70 = vpack.c.bf16 %v63, %v56
    %v71 = vpack.c.bf16 %v64, %v57
    %v72 = vpack.c.bf16 %v65, %v58
    %v73 = vpack.c.bf16 %v66, %v59
    %v74 = vpack.c.bf16 %v67, %v60
    %v75 = vpack.c.bf16 %v68, %v61
    %v76 = vld [vmem:[%s1] sm:$0xff]
    %v77 = vld [vmem:[%s1 + $0x8] sm:$0xff]
    %v78 = vld [vmem:[%s1 + $0x10] sm:$0xff]
    %v79 = vld [vmem:[%s1 + $0x18] sm:$0xff]
    %v80 = vld [vmem:[%s1 + $0x20] sm:$0xff]
    %v81 = vld [vmem:[%s1 + $0x28] sm:$0xff]
    %v82 = vld [vmem:[%s1 + $0x30] sm:$0xff]
    %v83 = vld [vmem:[%s1 + $0x38] sm:$0xff]
    %v84 = vld [vmem:[%s1 + $0x40] sm:$0xff]
    %v85 = vld [vmem:[%s1 + $0x48] sm:$0xff]
    %v86 = vld [vmem:[%s1 + $0x50] sm:$0xff]
    %v87 = vld [vmem:[%s1 + $0x58] sm:$0xff]
    %v88 = vld [vmem:[%s1 + $0x60] sm:$0xff]
    %v89 = vld [vmem:[%s1 + $0x68] sm:$0xff]
    %v90 = vld [vmem:[%s1 + $0x70] sm:$0xff]
    %v91 = vld [vmem:[%s1 + $0x78] sm:$0xff]
    %v92 = vld [vmem:[%s1 + $0x80] sm:$0xff]
    %v93 = vld [vmem:[%s1 + $0x88] sm:$0xff]
    %v94 = vld [vmem:[%s1 + $0x90] sm:$0xff]
    %v95 = vld [vmem:[%s1 + $0x98] sm:$0xff]
    %v96 = vld [vmem:[%s1 + $0xa0] sm:$0xff]
    %v97 = vld [vmem:[%s1 + $0xa8] sm:$0xff]
    %v98 = vld [vmem:[%s1 + $0xb0] sm:$0xff]
    %v99 = vld [vmem:[%s1 + $0xb8] sm:$0xff]
    %v100 = vld [vmem:[%s1 + $0xc0] sm:$0xff]
    %v101 = vld [vmem:[%s1 + $0xc8] sm:$0xff]
    %v102 = vld [vmem:[%s1 + $0xd0] sm:$0xff]
    %v103 = vld [vmem:[%s1 + $0xd8] sm:$0xff]
    %v104 = vld [vmem:[%s1 + $0xe0] sm:$0xff]
    %v105 = vld [vmem:[%s1 + $0xe8] sm:$0xff]
    %v106 = vld [vmem:[%s1 + $0xf0] sm:$0xff]
    %v107 = vld [vmem:[%s1 + $0xf8] sm:$0xff]
    %v108 = vld [vmem:[%s1 + $0x100] sm:$0xff]
    %v109 = vld [vmem:[%s1 + $0x108] sm:$0xff]
    %v110 = vld [vmem:[%s1 + $0x110] sm:$0xff]
    %v111 = vld [vmem:[%s1 + $0x118] sm:$0xff]
    %v112 = vld [vmem:[%s1 + $0x120] sm:$0xff]
    %v113 = vld [vmem:[%s1 + $0x128] sm:$0xff]
    %v114 = vld [vmem:[%s1 + $0x130] sm:$0xff]
    %v115 = vld [vmem:[%s1 + $0x138] sm:$0xff]
    %v116 = vld [vmem:[%s1 + $0x140] sm:$0xff]
    %v117 = vld [vmem:[%s1 + $0x148] sm:$0xff]
    %v118 = vld [vmem:[%s1 + $0x150] sm:$0xff]
    %v119 = vld [vmem:[%s1 + $0x158] sm:$0xff]
    %v120 = vld [vmem:[%s1 + $0x160] sm:$0xff]
    %v121 = vld [vmem:[%s1 + $0x168] sm:$0xff]
    %v122 = vld [vmem:[%s1 + $0x170] sm:$0xff]
    %v123 = vld [vmem:[%s1 + $0x178] sm:$0xff]
    %v124 = vld [vmem:[%s1 + $0x180] sm:$0xff]
    %v125 = vld [vmem:[%s1 + $0x188] sm:$0xff]
    %v126 = vld [vmem:[%s1 + $0x190] sm:$0xff]
    %v127 = vld [vmem:[%s1 + $0x198] sm:$0xff]
    %v128 = vld [vmem:[%s1 + $0x1a0] sm:$0xff]
    %v129 = vld [vmem:[%s1 + $0x1a8] sm:$0xff]
    %v130 = vld [vmem:[%s1 + $0x1b0] sm:$0xff]
    %v131 = vld [vmem:[%s1 + $0x1b8] sm:$0xff]
    %v132 = vld [vmem:[%s1 + $0x1c0] sm:$0xff]
    %v133 = vld [vmem:[%s1 + $0x1c8] sm:$0xff]
    %v134 = vld [vmem:[%s1 + $0x1d0] sm:$0xff]
    %v135 = vld [vmem:[%s1 + $0x1d8] sm:$0xff]
    %v136 = vld [vmem:[%s1 + $0x1e0] sm:$0xff]
    %v137 = vld [vmem:[%s1 + $0x1e8] sm:$0xff]
    %v138 = vld [vmem:[%s1 + $0x1f0] sm:$0xff]
    %v139 = vld [vmem:[%s1 + $0x1f8] sm:$0xff]
    %v140 = vld [vmem:[%s1 + $0x200] sm:$0xff]
    %v141 = vld [vmem:[%s1 + $0x208] sm:$0xff]
    %v142 = vld [vmem:[%s1 + $0x210] sm:$0xff]
    %v143 = vld [vmem:[%s1 + $0x218] sm:$0xff]
    %v144 = vld [vmem:[%s1 + $0x220] sm:$0xff]
    %v145 = vld [vmem:[%s1 + $0x228] sm:$0xff]
    %v146 = vld [vmem:[%s1 + $0x230] sm:$0xff]
    %v147 = vld [vmem:[%s1 + $0x238] sm:$0xff]
    %v148 = vld [vmem:[%s1 + $0x240] sm:$0xff]
    %v149 = vld [vmem:[%s1 + $0x248] sm:$0xff]
    %v150 = vld [vmem:[%s1 + $0x250] sm:$0xff]
    %v151 = vld [vmem:[%s1 + $0x258] sm:$0xff]
    %v152 = vld [vmem:[%s1 + $0x260] sm:$0xff]
    %v153 = vld [vmem:[%s1 + $0x268] sm:$0xff]
    %v154 = vld [vmem:[%s1 + $0x270] sm:$0xff]
    %v155 = vld [vmem:[%s1 + $0x278] sm:$0xff]
    %v156 = vld [vmem:[%s1 + $0x280] sm:$0xff]
    %v157 = vld [vmem:[%s1 + $0x288] sm:$0xff]
    %v158 = vld [vmem:[%s1 + $0x290] sm:$0xff]
    %v159 = vld [vmem:[%s1 + $0x298] sm:$0xff]
    %v160 = vld [vmem:[%s1 + $0x2a0] sm:$0xff]
    %v161 = vld [vmem:[%s1 + $0x2a8] sm:$0xff]
    %v162 = vld [vmem:[%s1 + $0x2b0] sm:$0xff]
    %v163 = vld [vmem:[%s1 + $0x2b8] sm:$0xff]
    %v164 = vld [vmem:[%s1 + $0x2c0] sm:$0xff]
    %v165 = vld [vmem:[%s1 + $0x2c8] sm:$0xff]
    %v166 = vld [vmem:[%s1 + $0x2d0] sm:$0xff]
    %v167 = vld [vmem:[%s1 + $0x2d8] sm:$0xff]
    %v168 = vld [vmem:[%s1 + $0x2e0] sm:$0xff]
    %v169 = vld [vmem:[%s1 + $0x2e8] sm:$0xff]
    %v170 = vld [vmem:[%s1 + $0x2f0] sm:$0xff]
    %v171 = vld [vmem:[%s1 + $0x2f8] sm:$0xff]
    %v172 = vld [vmem:[%s1 + $0x300] sm:$0xff]
    %v173 = vld [vmem:[%s1 + $0x308] sm:$0xff]
    %v174 = vld [vmem:[%s2] sm:$0x3]
    %v176 = vlaneseq
    %v177 = vshrl.u32 %v176, 7
    %v178 = vsub.s32 0, %v177
    %v179 = vrot.slane %v174, %v178
    %v180 = vlaneseq
    %v181 = vshrl.u32 %v180, 7
    %v182 = vsub.s32 1, %v181
    %v183 = vrot.slane %v174, %v182
    %v284 = vunpack.c.l.b16 %v76
    %v285 = vunpack.c.h.b16 %v76
    %v286 = vunpack.c.l.b16 %v77
    %v287 = vunpack.c.h.b16 %v77
    %v288 = vunpack.c.l.b16 %v78
    %v289 = vunpack.c.h.b16 %v78
    %v290 = vunpack.c.l.b16 %v79
    %v291 = vunpack.c.h.b16 %v79
    %v292 = vunpack.c.l.b16 %v80
    %v293 = vunpack.c.h.b16 %v80
    %v294 = vunpack.c.l.b16 %v81
    %v295 = vunpack.c.h.b16 %v81
    %v296 = vunpack.c.l.b16 %v82
    %v297 = vunpack.c.h.b16 %v82
    %v298 = vunpack.c.l.b16 %v83
    %v299 = vunpack.c.h.b16 %v83
    %v300 = vunpack.c.l.b16 %v84
    %v301 = vunpack.c.h.b16 %v84
    %v302 = vunpack.c.l.b16 %v85
    %v303 = vunpack.c.h.b16 %v85
    %v304 = vunpack.c.l.b16 %v86
    %v305 = vunpack.c.h.b16 %v86
    %v306 = vunpack.c.l.b16 %v87
    %v307 = vunpack.c.h.b16 %v87
    %v308 = vunpack.c.l.b16 %v88
    %v309 = vunpack.c.h.b16 %v88
    %v310 = vunpack.c.l.b16 %v89
    %v311 = vunpack.c.h.b16 %v89
    %v312 = vunpack.c.l.b16 %v90
    %v313 = vunpack.c.h.b16 %v90
    %v314 = vunpack.c.l.b16 %v91
    %v315 = vunpack.c.h.b16 %v91
    %v316 = vunpack.c.l.b16 %v92
    %v317 = vunpack.c.h.b16 %v92
    %v318 = vunpack.c.l.b16 %v93
    %v319 = vunpack.c.h.b16 %v93
    %v320 = vunpack.c.l.b16 %v94
    %v321 = vunpack.c.h.b16 %v94
    %v322 = vunpack.c.l.b16 %v95
    %v323 = vunpack.c.h.b16 %v95
    %v324 = vunpack.c.l.b16 %v96
    %v325 = vunpack.c.h.b16 %v96
    %v326 = vunpack.c.l.b16 %v97
    %v327 = vunpack.c.h.b16 %v97
    %v328 = vunpack.c.l.b16 %v98
    %v329 = vunpack.c.h.b16 %v98
    %v330 = vunpack.c.l.b16 %v99
    %v331 = vunpack.c.h.b16 %v99
    %v332 = vunpack.c.l.b16 %v100
    %v333 = vunpack.c.h.b16 %v100
    %v334 = vunpack.c.l.b16 %v101
    %v335 = vunpack.c.h.b16 %v101
    %v336 = vunpack.c.l.b16 %v102
    %v337 = vunpack.c.h.b16 %v102
    %v338 = vunpack.c.l.b16 %v103
    %v339 = vunpack.c.h.b16 %v103
    %v340 = vunpack.c.l.b16 %v104
    %v341 = vunpack.c.h.b16 %v104
    %v342 = vunpack.c.l.b16 %v105
    %v343 = vunpack.c.h.b16 %v105
    %v344 = vunpack.c.l.b16 %v106
    %v345 = vunpack.c.h.b16 %v106
    %v346 = vunpack.c.l.b16 %v107
    %v347 = vunpack.c.h.b16 %v107
    %v348 = vunpack.c.l.b16 %v108
    %v349 = vunpack.c.h.b16 %v108
    %v350 = vunpack.c.l.b16 %v109
    %v351 = vunpack.c.h.b16 %v109
    %v352 = vunpack.c.l.b16 %v110
    %v353 = vunpack.c.h.b16 %v110
    %v354 = vunpack.c.l.b16 %v111
    %v355 = vunpack.c.h.b16 %v111
    %v356 = vunpack.c.l.b16 %v112
    %v357 = vunpack.c.h.b16 %v112
    %v358 = vunpack.c.l.b16 %v113
    %v359 = vunpack.c.h.b16 %v113
    %v360 = vunpack.c.l.b16 %v114
    %v361 = vunpack.c.h.b16 %v114
    %v362 = vunpack.c.l.b16 %v115
    %v363 = vunpack.c.h.b16 %v115
    %v364 = vunpack.c.l.b16 %v116
    %v365 = vunpack.c.h.b16 %v116
    %v366 = vunpack.c.l.b16 %v117
    %v367 = vunpack.c.h.b16 %v117
    %v368 = vunpack.c.l.b16 %v118
    %v369 = vunpack.c.h.b16 %v118
    %v370 = vunpack.c.l.b16 %v119
    %v371 = vunpack.c.h.b16 %v119
    %v372 = vunpack.c.l.b16 %v120
    %v373 = vunpack.c.h.b16 %v120
    %v374 = vunpack.c.l.b16 %v121
    %v375 = vunpack.c.h.b16 %v121
    %v376 = vunpack.c.l.b16 %v122
    %v377 = vunpack.c.h.b16 %v122
    %v378 = vunpack.c.l.b16 %v123
    %v379 = vunpack.c.h.b16 %v123
    %v380 = vunpack.c.l.b16 %v124
    %v381 = vunpack.c.h.b16 %v124
    %v382 = vunpack.c.l.b16 %v125
    %v383 = vunpack.c.h.b16 %v125
    %v384 = vunpack.c.l.b16 %v126
    %v385 = vunpack.c.h.b16 %v126
    %v386 = vunpack.c.l.b16 %v127
    %v387 = vunpack.c.h.b16 %v127
    %v388 = vunpack.c.l.b16 %v128
    %v389 = vunpack.c.h.b16 %v128
    %v390 = vunpack.c.l.b16 %v129
    %v391 = vunpack.c.h.b16 %v129
    %v392 = vunpack.c.l.b16 %v130
    %v393 = vunpack.c.h.b16 %v130
    %v394 = vunpack.c.l.b16 %v131
    %v395 = vunpack.c.h.b16 %v131
    %v396 = vunpack.c.l.b16 %v132
    %v397 = vunpack.c.h.b16 %v132
    %v398 = vunpack.c.l.b16 %v133
    %v399 = vunpack.c.h.b16 %v133
    %v400 = vunpack.c.l.b16 %v134
    %v401 = vunpack.c.h.b16 %v134
    %v402 = vunpack.c.l.b16 %v135
    %v403 = vunpack.c.h.b16 %v135
    %v404 = vunpack.c.l.b16 %v136
    %v405 = vunpack.c.h.b16 %v136
    %v406 = vunpack.c.l.b16 %v137
    %v407 = vunpack.c.h.b16 %v137
    %v408 = vunpack.c.l.b16 %v138
    %v409 = vunpack.c.h.b16 %v138
    %v410 = vunpack.c.l.b16 %v139
    %v411 = vunpack.c.h.b16 %v139
    %v412 = vunpack.c.l.b16 %v140
    %v413 = vunpack.c.h.b16 %v140
    %v414 = vunpack.c.l.b16 %v141
    %v415 = vunpack.c.h.b16 %v141
    %v416 = vunpack.c.l.b16 %v142
    %v417 = vunpack.c.h.b16 %v142
    %v418 = vunpack.c.l.b16 %v143
    %v419 = vunpack.c.h.b16 %v143
    %v420 = vunpack.c.l.b16 %v144
    %v421 = vunpack.c.h.b16 %v144
    %v422 = vunpack.c.l.b16 %v145
    %v423 = vunpack.c.h.b16 %v145
    %v424 = vunpack.c.l.b16 %v146
    %v425 = vunpack.c.h.b16 %v146
    %v426 = vunpack.c.l.b16 %v147
    %v427 = vunpack.c.h.b16 %v147
    %v428 = vunpack.c.l.b16 %v148
    %v429 = vunpack.c.h.b16 %v148
    %v430 = vunpack.c.l.b16 %v149
    %v431 = vunpack.c.h.b16 %v149
    %v432 = vunpack.c.l.b16 %v150
    %v433 = vunpack.c.h.b16 %v150
    %v434 = vunpack.c.l.b16 %v151
    %v435 = vunpack.c.h.b16 %v151
    %v436 = vunpack.c.l.b16 %v152
    %v437 = vunpack.c.h.b16 %v152
    %v438 = vunpack.c.l.b16 %v153
    %v439 = vunpack.c.h.b16 %v153
    %v440 = vunpack.c.l.b16 %v154
    %v441 = vunpack.c.h.b16 %v154
    %v442 = vunpack.c.l.b16 %v155
    %v443 = vunpack.c.h.b16 %v155
    %v444 = vunpack.c.l.b16 %v156
    %v445 = vunpack.c.h.b16 %v156
    %v446 = vunpack.c.l.b16 %v157
    %v447 = vunpack.c.h.b16 %v157
    %v448 = vunpack.c.l.b16 %v158
    %v449 = vunpack.c.h.b16 %v158
    %v450 = vunpack.c.l.b16 %v159
    %v451 = vunpack.c.h.b16 %v159
    %v452 = vunpack.c.l.b16 %v160
    %v453 = vunpack.c.h.b16 %v160
    %v454 = vunpack.c.l.b16 %v161
    %v455 = vunpack.c.h.b16 %v161
    %v456 = vunpack.c.l.b16 %v162
    %v457 = vunpack.c.h.b16 %v162
    %v458 = vunpack.c.l.b16 %v163
    %v459 = vunpack.c.h.b16 %v163
    %v460 = vunpack.c.l.b16 %v164
    %v461 = vunpack.c.h.b16 %v164
    %v462 = vunpack.c.l.b16 %v165
    %v463 = vunpack.c.h.b16 %v165
    %v464 = vunpack.c.l.b16 %v166
    %v465 = vunpack.c.h.b16 %v166
    %v466 = vunpack.c.l.b16 %v167
    %v467 = vunpack.c.h.b16 %v167
    %v468 = vunpack.c.l.b16 %v168
    %v469 = vunpack.c.h.b16 %v168
    %v470 = vunpack.c.l.b16 %v169
    %v471 = vunpack.c.h.b16 %v169
    %v472 = vunpack.c.l.b16 %v170
    %v473 = vunpack.c.h.b16 %v170
    %v474 = vunpack.c.l.b16 %v171
    %v475 = vunpack.c.h.b16 %v171
    %v476 = vunpack.c.l.b16 %v172
    %v477 = vunpack.c.h.b16 %v172
    %v478 = vunpack.c.l.b16 %v173
    %v479 = vunpack.c.h.b16 %v173
    %v480 = vpack.c.b16 %v286, %v284
    %v481 = vpack.c.b16 %v287, %v285
    %v482 = vpack.c.b16 %v290, %v288
    %v483 = vpack.c.b16 %v291, %v289
    %v484 = vpack.c.b16 %v294, %v292
    %v485 = vpack.c.b16 %v295, %v293
    %v486 = vpack.c.b16 %v298, %v296
    %v487 = vpack.c.b16 %v299, %v297
    %v488 = vpack.c.b16 %v302, %v300
    %v489 = vpack.c.b16 %v303, %v301
    %v490 = vpack.c.b16 %v306, %v304
    %v491 = vpack.c.b16 %v307, %v305
    %v492 = vpack.c.b16 %v310, %v308
    %v493 = vpack.c.b16 %v311, %v309
    %v494 = vpack.c.b16 %v314, %v312
    %v495 = vpack.c.b16 %v315, %v313
    %v496 = vpack.c.b16 %v318, %v316
    %v497 = vpack.c.b16 %v319, %v317
    %v498 = vpack.c.b16 %v322, %v320
    %v499 = vpack.c.b16 %v323, %v321
    %v500 = vpack.c.b16 %v326, %v324
    %v501 = vpack.c.b16 %v327, %v325
    %v502 = vpack.c.b16 %v330, %v328
    %v503 = vpack.c.b16 %v331, %v329
    %v504 = vpack.c.b16 %v334, %v332
    %v505 = vpack.c.b16 %v335, %v333
    %v506 = vpack.c.b16 %v338, %v336
    %v507 = vpack.c.b16 %v339, %v337
    %v508 = vpack.c.b16 %v342, %v340
    %v509 = vpack.c.b16 %v343, %v341
    %v510 = vpack.c.b16 %v346, %v344
    %v511 = vpack.c.b16 %v347, %v345
    %v512 = vpack.c.b16 %v350, %v348
    %v513 = vpack.c.b16 %v351, %v349
    %v514 = vpack.c.b16 %v354, %v352
    %v515 = vpack.c.b16 %v355, %v353
    %v516 = vpack.c.b16 %v358, %v356
    %v517 = vpack.c.b16 %v359, %v357
    %v518 = vpack.c.b16 %v362, %v360
    %v519 = vpack.c.b16 %v363, %v361
    %v520 = vpack.c.b16 %v366, %v364
    %v521 = vpack.c.b16 %v367, %v365
    %v522 = vpack.c.b16 %v370, %v368
    %v523 = vpack.c.b16 %v371, %v369
    %v524 = vpack.c.b16 %v374, %v372
    %v525 = vpack.c.b16 %v375, %v373
    %v526 = vpack.c.b16 %v378, %v376
    %v527 = vpack.c.b16 %v379, %v377
    %v528 = vpack.c.b16 %v382, %v380
    %v529 = vpack.c.b16 %v383, %v381
    %v530 = vpack.c.b16 %v386, %v384
    %v531 = vpack.c.b16 %v387, %v385
    %v532 = vpack.c.b16 %v390, %v388
    %v533 = vpack.c.b16 %v391, %v389
    %v534 = vpack.c.b16 %v394, %v392
    %v535 = vpack.c.b16 %v395, %v393
    %v536 = vpack.c.b16 %v398, %v396
    %v537 = vpack.c.b16 %v399, %v397
    %v538 = vpack.c.b16 %v402, %v400
    %v539 = vpack.c.b16 %v403, %v401
    %v540 = vpack.c.b16 %v406, %v404
    %v541 = vpack.c.b16 %v407, %v405
    %v542 = vpack.c.b16 %v410, %v408
    %v543 = vpack.c.b16 %v411, %v409
    %v544 = vpack.c.b16 %v414, %v412
    %v545 = vpack.c.b16 %v415, %v413
    %v546 = vpack.c.b16 %v418, %v416
    %v547 = vpack.c.b16 %v419, %v417
    %v548 = vpack.c.b16 %v422, %v420
    %v549 = vpack.c.b16 %v423, %v421
    %v550 = vpack.c.b16 %v426, %v424
    %v551 = vpack.c.b16 %v427, %v425
    %v552 = vpack.c.b16 %v430, %v428
    %v553 = vpack.c.b16 %v431, %v429
    %v554 = vpack.c.b16 %v434, %v432
    %v555 = vpack.c.b16 %v435, %v433
    %v556 = vpack.c.b16 %v438, %v436
    %v557 = vpack.c.b16 %v439, %v437
    %v558 = vpack.c.b16 %v442, %v440
    %v559 = vpack.c.b16 %v443, %v441
    %v560 = vpack.c.b16 %v446, %v444
    %v561 = vpack.c.b16 %v447, %v445
    %v562 = vpack.c.b16 %v450, %v448
    %v563 = vpack.c.b16 %v451, %v449
    %v564 = vpack.c.b16 %v454, %v452
    %v565 = vpack.c.b16 %v455, %v453
    %v566 = vpack.c.b16 %v458, %v456
    %v567 = vpack.c.b16 %v459, %v457
    %v568 = vpack.c.b16 %v462, %v460
    %v569 = vpack.c.b16 %v463, %v461
    %v570 = vpack.c.b16 %v466, %v464
    %v571 = vpack.c.b16 %v467, %v465
    %v572 = vpack.c.b16 %v470, %v468
    %v573 = vpack.c.b16 %v471, %v469
    %v574 = vpack.c.b16 %v474, %v472
    %v575 = vpack.c.b16 %v475, %v473
    %v576 = vpack.c.b16 %v478, %v476
    %v577 = vpack.c.b16 %v479, %v477
    %vm676 = vcmask 130048
    %v678 = vsel %vm676, %v75, 0
    %680 = vmatprep.subr.bf16.mxu0 %v481
    %681 = vmatpush1.bf16.msra.mxu0 %v480
    %682 = vmatprep.subr.bf16.mxu0 %v483
    %683 = vmatpush1.bf16.msra.mxu0 %v482
    %684 = vmatprep.subr.bf16.mxu0 %v485
    %685 = vmatpush1.bf16.msra.mxu0 %v484
    %686 = vmatprep.subr.bf16.mxu0 %v487
    %687 = vmatpush1.bf16.msra.mxu0 %v486
    %688 = vmatprep.subr.bf16.mxu0 %v489
    %689 = vmatpush1.bf16.msra.mxu0 %v488
    %690 = vmatprep.subr.bf16.mxu0 %v491
    %691 = vmatpush1.bf16.msra.mxu0 %v490
    %692 = vmatprep.subr.bf16.mxu0 %v493
    %693 = vmatpush1.bf16.msra.mxu0 %v492
    %694 = vmatprep.subr.bf16.mxu0 %v495
    %695 = vmatpush1.bf16.msra.mxu0 %v494
    %696 = vmatprep.subr.bf16.mxu0 %v497
    %697 = vmatpush1.bf16.msra.mxu0 %v496
    %698 = vmatprep.subr.bf16.mxu0 %v499
    %699 = vmatpush1.bf16.msra.mxu0 %v498
    %700 = vmatprep.subr.bf16.mxu0 %v501
    %701 = vmatpush1.bf16.msra.mxu0 %v500
    %702 = vmatprep.subr.bf16.mxu0 %v503
    %703 = vmatpush1.bf16.msra.mxu0 %v502
    %704 = vmatprep.subr.bf16.mxu0 %v505
    %705 = vmatpush1.bf16.msra.mxu0 %v504
    %706 = vmatprep.subr.bf16.mxu0 %v507
    %707 = vmatpush1.bf16.msra.mxu0 %v506
    %708 = vmatprep.subr.bf16.mxu0 %v509
    %709 = vmatpush1.bf16.msra.mxu0 %v508
    %710 = vmatprep.subr.bf16.mxu0 %v511
    %711 = vmatpush1.bf16.msra.mxu0 %v510
    %712 = vmatprep.mubr.bf16.mxu0 %v70
    %713 = vmatmul.mubr.bf16.gmra.mrb[0].mxu0 %v69
    %v714 = vpop.f32.mrb[0].mxu0
    %v715 = vadd.f32 %v179, %v714
    %v716 = vpop.f32.mrb[0].mxu0
    %v717 = vadd.f32 %v183, %v716
    %v718 = vpop.f32.mrb[0].mxu0
    %v719 = vadd.f32 %v179, %v718
    %v720 = vpop.f32.mrb[0].mxu0
    %v721 = vadd.f32 %v183, %v720
    %722 = vdwg.mxu0
    %723 = vmatprep.subr.bf16.mxu0 %v513
    %724 = vmatpush1.bf16.msra.mxu0 %v512
    %725 = vmatprep.subr.bf16.mxu0 %v515
    %726 = vmatpush1.bf16.msra.mxu0 %v514
    %727 = vmatprep.subr.bf16.mxu0 %v517
    %728 = vmatpush1.bf16.msra.mxu0 %v516
    %729 = vmatprep.subr.bf16.mxu0 %v519
    %730 = vmatpush1.bf16.msra.mxu0 %v518
    %731 = vmatprep.subr.bf16.mxu0 %v521
    %732 = vmatpush1.bf16.msra.mxu0 %v520
    %733 = vmatprep.subr.bf16.mxu0 %v523
    %734 = vmatpush1.bf16.msra.mxu0 %v522
    %735 = vmatprep.subr.bf16.mxu0 %v525
    %736 = vmatpush1.bf16.msra.mxu0 %v524
    %737 = vmatprep.subr.bf16.mxu0 %v527
    %738 = vmatpush1.bf16.msra.mxu0 %v526
    %739 = vmatprep.subr.bf16.mxu0 %v529
    %740 = vmatpush1.bf16.msra.mxu0 %v528
    %741 = vmatprep.subr.bf16.mxu0 %v531
    %742 = vmatpush1.bf16.msra.mxu0 %v530
    %743 = vmatprep.subr.bf16.mxu0 %v533
    %744 = vmatpush1.bf16.msra.mxu0 %v532
    %745 = vmatprep.subr.bf16.mxu0 %v535
    %746 = vmatpush1.bf16.msra.mxu0 %v534
    %747 = vmatprep.subr.bf16.mxu0 %v537
    %748 = vmatpush1.bf16.msra.mxu0 %v536
    %749 = vmatprep.subr.bf16.mxu0 %v539
    %750 = vmatpush1.bf16.msra.mxu0 %v538
    %751 = vmatprep.subr.bf16.mxu0 %v541
    %752 = vmatpush1.bf16.msra.mxu0 %v540
    %753 = vmatprep.subr.bf16.mxu0 %v543
    %754 = vmatpush1.bf16.msra.mxu0 %v542
    %755 = vmatprep.mubr.bf16.mxu0 %v72
    %756 = vmatmul.mubr.bf16.gmra.mrb[0].mxu0 %v71
    %v757 = vpop.f32.mrb[0].mxu0
    %v758 = vadd.f32 %v715, %v757
    %v759 = vpop.f32.mrb[0].mxu0
    %v760 = vadd.f32 %v717, %v759
    %v761 = vpop.f32.mrb[0].mxu0
    %v762 = vadd.f32 %v719, %v761
    %v763 = vpop.f32.mrb[0].mxu0
    %v764 = vadd.f32 %v721, %v763
    %765 = vdwg.mxu0
    %766 = vmatprep.subr.bf16.mxu0 %v545
    %767 = vmatpush1.bf16.msra.mxu0 %v544
    %768 = vmatprep.subr.bf16.mxu0 %v547
    %769 = vmatpush1.bf16.msra.mxu0 %v546
    %770 = vmatprep.subr.bf16.mxu0 %v549
    %771 = vmatpush1.bf16.msra.mxu0 %v548
    %772 = vmatprep.subr.bf16.mxu0 %v551
    %773 = vmatpush1.bf16.msra.mxu0 %v550
    %774 = vmatprep.subr.bf16.mxu0 %v553
    %775 = vmatpush1.bf16.msra.mxu0 %v552
    %776 = vmatprep.subr.bf16.mxu0 %v555
    %777 = vmatpush1.bf16.msra.mxu0 %v554
    %778 = vmatprep.subr.bf16.mxu0 %v557
    %779 = vmatpush1.bf16.msra.mxu0 %v556
    %780 = vmatprep.subr.bf16.mxu0 %v559
    %781 = vmatpush1.bf16.msra.mxu0 %v558
    %782 = vmatprep.subr.bf16.mxu0 %v561
    %783 = vmatpush1.bf16.msra.mxu0 %v560
    %784 = vmatprep.subr.bf16.mxu0 %v563
    %785 = vmatpush1.bf16.msra.mxu0 %v562
    %786 = vmatprep.subr.bf16.mxu0 %v565
    %787 = vmatpush1.bf16.msra.mxu0 %v564
    %788 = vmatprep.subr.bf16.mxu0 %v567
    %789 = vmatpush1.bf16.msra.mxu0 %v566
    %790 = vmatprep.subr.bf16.mxu0 %v569
    %791 = vmatpush1.bf16.msra.mxu0 %v568
    %792 = vmatprep.subr.bf16.mxu0 %v571
    %793 = vmatpush1.bf16.msra.mxu0 %v570
    %794 = vmatprep.subr.bf16.mxu0 %v573
    %795 = vmatpush1.bf16.msra.mxu0 %v572
    %796 = vmatprep.subr.bf16.mxu0 %v575
    %797 = vmatpush1.bf16.msra.mxu0 %v574
    %798 = vmatprep.mubr.bf16.mxu0 %v74
    %799 = vmatmul.mubr.bf16.gmra.mrb[0].mxu0 %v73
    %v800 = vpop.f32.mrb[0].mxu0
    %v801 = vadd.f32 %v758, %v800
    %v802 = vpop.f32.mrb[0].mxu0
    %v803 = vadd.f32 %v760, %v802
    %v804 = vpop.f32.mrb[0].mxu0
    %v805 = vadd.f32 %v762, %v804
    %v806 = vpop.f32.mrb[0].mxu0
    %v807 = vadd.f32 %v764, %v806
    %808 = vdwg.mxu0
    %809 = vmatprep.subr.bf16.mxu0 %v577
    %810 = vmatpush1.bf16.msra.mxu0 %v576
    %811 = vmatprep.subr.bf16.mxu0 0
    %812 = vmatpush1.bf16.msra.mxu0 0
    %813 = vmatprep.subr.bf16.mxu0 0
    %814 = vmatpush1.bf16.msra.mxu0 0
    %815 = vmatprep.subr.bf16.mxu0 0
    %816 = vmatpush1.bf16.msra.mxu0 0
    %817 = vmatprep.subr.bf16.mxu0 0
    %818 = vmatpush1.bf16.msra.mxu0 0
    %819 = vmatprep.subr.bf16.mxu0 0
    %820 = vmatpush1.bf16.msra.mxu0 0
    %821 = vmatprep.subr.bf16.mxu0 0
    %822 = vmatpush1.bf16.msra.mxu0 0
    %823 = vmatprep.subr.bf16.mxu0 0
    %824 = vmatpush1.bf16.msra.mxu0 0
    %825 = vmatprep.subr.bf16.mxu0 0
    %826 = vmatpush1.bf16.msra.mxu0 0
    %827 = vmatprep.subr.bf16.mxu0 0
    %828 = vmatpush1.bf16.msra.mxu0 0
    %829 = vmatprep.subr.bf16.mxu0 0
    %830 = vmatpush1.bf16.msra.mxu0 0
    %831 = vmatprep.subr.bf16.mxu0 0
    %832 = vmatpush1.bf16.msra.mxu0 0
    %833 = vmatprep.subr.bf16.mxu0 0
    %834 = vmatpush1.bf16.msra.mxu0 0
    %835 = vmatprep.subr.bf16.mxu0 0
    %836 = vmatpush1.bf16.msra.mxu0 0
    %837 = vmatprep.subr.bf16.mxu0 0
    %838 = vmatpush1.bf16.msra.mxu0 0
    %839 = vmatprep.subr.bf16.mxu0 0
    %840 = vmatpush1.bf16.msra.mxu0 0
    %841 = vmatprep.mubr.bf16.mxu0 0
    %842 = vmatmul.mubr.bf16.gmra.mrb[0].mxu0 %v678
    %v843 = vpop.f32.mrb[0].mxu0
    %v844 = vadd.f32 %v801, %v843
    %v845 = vpop.f32.mrb[0].mxu0
    %v846 = vadd.f32 %v803, %v845
    %v847 = vpop.f32.mrb[0].mxu0
    %v848 = vadd.f32 %v805, %v847
    %v849 = vpop.f32.mrb[0].mxu0
    %v850 = vadd.f32 %v807, %v849
    %851 = vdwg.mxu0
    %vm852 = vcmp.gt.f32.partialorder %v844, 0.0
    %vm853 = vcmp.gt.f32.partialorder %v846, 0.0
    %vm854 = vcmp.gt.f32.partialorder %v848, 0.0
    %vm855 = vcmp.gt.f32.partialorder %v850, 0.0
    %v856 = vmul.f32 %v844, 0.01
    %v857 = vmul.f32 %v846, 0.01
    %v858 = vmul.f32 %v848, 0.01
    %v859 = vmul.f32 %v850, 0.01
    %v860 = vsel %vm852, %v844, %v856
    %v861 = vsel %vm853, %v846, %v857
    %v862 = vsel %vm854, %v848, %v858
    %v863 = vsel %vm855, %v850, %v859
    %v864 = vpack.c.bf16 %v862, %v860
    %v865 = vpack.c.bf16 %v863, %v861
    %v866 = vld [vmem:[#allocation2] sm:$0xf]
    %v867 = vld [vmem:[#allocation2 + $0x4] sm:$0xf]
    %v868 = vld [vmem:[#allocation2 + $0x8] sm:$0xf]
    %v869 = vld [vmem:[#allocation2 + $0xc] sm:$0xf]
    %v870 = vld [vmem:[#allocation2 + $0x10] sm:$0xf]
    %v871 = vld [vmem:[#allocation2 + $0x14] sm:$0xf]
    %v872 = vld [vmem:[#allocation2 + $0x18] sm:$0xf]
    %v873 = vld [vmem:[#allocation2 + $0x1c] sm:$0xf]
    %v874 = vld [vmem:[#allocation2 + $0x20] sm:$0xf]
    %v875 = vld [vmem:[#allocation2 + $0x24] sm:$0xf]
    %v876 = vld [vmem:[#allocation2 + $0x28] sm:$0xf]
    %v877 = vld [vmem:[#allocation2 + $0x2c] sm:$0xf]
    %v878 = vld [vmem:[#allocation2 + $0x30] sm:$0xf]
    %v879 = vld [vmem:[#allocation2 + $0x34] sm:$0xf]
    %v880 = vld [vmem:[#allocation2 + $0x38] sm:$0xf]
    %v881 = vld [vmem:[#allocation2 + $0x3c] sm:$0xf]
    %v882 = vld [vmem:[#allocation2 + $0x40] sm:$0xf]
    %v883 = vld [vmem:[#allocation2 + $0x44] sm:$0xf]
    %v884 = vld [vmem:[#allocation2 + $0x48] sm:$0xf]
    %v885 = vld [vmem:[#allocation2 + $0x4c] sm:$0xf]
    %v886 = vld [vmem:[#allocation2 + $0x50] sm:$0xf]
    %v887 = vld [vmem:[#allocation2 + $0x54] sm:$0xf]
    %v888 = vld [vmem:[#allocation2 + $0x58] sm:$0xf]
    %v889 = vld [vmem:[#allocation2 + $0x5c] sm:$0xf]
    %v890 = vld [vmem:[#allocation2 + $0x60] sm:$0xf]
    %v891 = vld [vmem:[#allocation2 + $0x64] sm:$0xf]
    %v892 = vld [vmem:[#allocation2 + $0x68] sm:$0xf]
    %v893 = vld [vmem:[#allocation2 + $0x6c] sm:$0xf]
    %v894 = vld [vmem:[#allocation2 + $0x70] sm:$0xf]
    %v895 = vld [vmem:[#allocation2 + $0x74] sm:$0xf]
    %v896 = vld [vmem:[#allocation2 + $0x78] sm:$0xf]
    %v897 = vld [vmem:[#allocation2 + $0x7c] sm:$0xf]
    %v898 = vld [vmem:[%s4] sm:$0x1]
    %v900 = vlaneseq
    %v901 = vshrl.u32 %v900, 7
    %v902 = vsub.s32 0, %v901
    %v903 = vrot.slane %v898, %v902
    %v937 = vunpack.c.l.b16 %v866
    %v938 = vunpack.c.l.b16 %v867
    %v939 = vunpack.c.l.b16 %v868
    %v940 = vunpack.c.l.b16 %v869
    %v941 = vunpack.c.l.b16 %v870
    %v942 = vunpack.c.l.b16 %v871
    %v943 = vunpack.c.l.b16 %v872
    %v944 = vunpack.c.l.b16 %v873
    %v945 = vunpack.c.l.b16 %v874
    %v946 = vunpack.c.l.b16 %v875
    %v947 = vunpack.c.l.b16 %v876
    %v948 = vunpack.c.l.b16 %v877
    %v949 = vunpack.c.l.b16 %v878
    %v950 = vunpack.c.l.b16 %v879
    %v951 = vunpack.c.l.b16 %v880
    %v952 = vunpack.c.l.b16 %v881
    %v953 = vunpack.c.l.b16 %v882
    %v954 = vunpack.c.l.b16 %v883
    %v955 = vunpack.c.l.b16 %v884
    %v956 = vunpack.c.l.b16 %v885
    %v957 = vunpack.c.l.b16 %v886
    %v958 = vunpack.c.l.b16 %v887
    %v959 = vunpack.c.l.b16 %v888
    %v960 = vunpack.c.l.b16 %v889
    %v961 = vunpack.c.l.b16 %v890
    %v962 = vunpack.c.l.b16 %v891
    %v963 = vunpack.c.l.b16 %v892
    %v964 = vunpack.c.l.b16 %v893
    %v965 = vunpack.c.l.b16 %v894
    %v966 = vunpack.c.l.b16 %v895
    %v967 = vunpack.c.l.b16 %v896
    %v968 = vunpack.c.l.b16 %v897
    %v969 = vpack.c.b16 %v938, %v937
    %v970 = vpack.c.b16 %v940, %v939
    %v971 = vpack.c.b16 %v942, %v941
    %v972 = vpack.c.b16 %v944, %v943
    %v973 = vpack.c.b16 %v946, %v945
    %v974 = vpack.c.b16 %v948, %v947
    %v975 = vpack.c.b16 %v950, %v949
    %v976 = vpack.c.b16 %v952, %v951
    %v977 = vpack.c.b16 %v954, %v953
    %v978 = vpack.c.b16 %v956, %v955
    %v979 = vpack.c.b16 %v958, %v957
    %v980 = vpack.c.b16 %v960, %v959
    %v981 = vpack.c.b16 %v962, %v961
    %v982 = vpack.c.b16 %v964, %v963
    %v983 = vpack.c.b16 %v966, %v965
    %v984 = vpack.c.b16 %v968, %v967
    %1001 = vmatprep.subr.bf16.mxu0 0
    %1002 = vmatpush1.bf16.msra.mxu0 %v969
    %1003 = vmatprep.subr.bf16.mxu0 0
    %1004 = vmatpush1.bf16.msra.mxu0 %v970
    %1005 = vmatprep.subr.bf16.mxu0 0
    %1006 = vmatpush1.bf16.msra.mxu0 %v971
    %1007 = vmatprep.subr.bf16.mxu0 0
    %1008 = vmatpush1.bf16.msra.mxu0 %v972
    %1009 = vmatprep.subr.bf16.mxu0 0
    %1010 = vmatpush1.bf16.msra.mxu0 %v973
    %1011 = vmatprep.subr.bf16.mxu0 0
    %1012 = vmatpush1.bf16.msra.mxu0 %v974
    %1013 = vmatprep.subr.bf16.mxu0 0
    %1014 = vmatpush1.bf16.msra.mxu0 %v975
    %1015 = vmatprep.subr.bf16.mxu0 0
    %1016 = vmatpush1.bf16.msra.mxu0 %v976
    %1017 = vmatprep.subr.bf16.mxu0 0
    %1018 = vmatpush1.bf16.msra.mxu0 %v977
    %1019 = vmatprep.subr.bf16.mxu0 0
    %1020 = vmatpush1.bf16.msra.mxu0 %v978
    %1021 = vmatprep.subr.bf16.mxu0 0
    %1022 = vmatpush1.bf16.msra.mxu0 %v979
    %1023 = vmatprep.subr.bf16.mxu0 0
    %1024 = vmatpush1.bf16.msra.mxu0 %v980
    %1025 = vmatprep.subr.bf16.mxu0 0
    %1026 = vmatpush1.bf16.msra.mxu0 %v981
    %1027 = vmatprep.subr.bf16.mxu0 0
    %1028 = vmatpush1.bf16.msra.mxu0 %v982
    %1029 = vmatprep.subr.bf16.mxu0 0
    %1030 = vmatpush1.bf16.msra.mxu0 %v983
    %1031 = vmatprep.subr.bf16.mxu0 0
    %1032 = vmatpush1.bf16.msra.mxu0 %v984
    %1033 = vmatprep.mubr.bf16.mxu0 %v865
    %1034 = vmatmul.mubr.bf16.gmra.mrb[0].mxu0 %v864
    %v1035 = vpop.f32.mrb[0].mxu0
    %v1036 = vadd.f32 %v903, %v1035
    %v1037 = vpop.f32.mrb[0].mxu0
    %v1038 = vpop.f32.mrb[0].mxu0
    %v1039 = vadd.f32 %v903, %v1038
    %v1040 = vpop.f32.mrb[0].mxu0
    %1041 = vdwg.mxu0
    %vm1042 = vcmp.gt.f32.partialorder %v1036, 0.0
    %vm1043 = vcmp.gt.f32.partialorder %v1039, 0.0
    %v1044 = vmul.f32 %v1036, 0.01
    %v1045 = vmul.f32 %v1039, 0.01
    %v1046 = vsel %vm1042, %v1036, %v1044
    %v1047 = vsel %vm1043, %v1039, %v1045
    %v1048 = vpack.c.bf16 %v1047, %v1046
    %v1049 = vld [vmem:[#allocation4] sm:$0xf]
    %v1050 = vld [vmem:[#allocation4 + $0x4] sm:$0xf]
    %v1051 = vld [vmem:[#allocation4 + $0x8] sm:$0xf]
    %v1052 = vld [vmem:[#allocation4 + $0xc] sm:$0xf]
    %v1053 = vld [vmem:[#allocation4 + $0x10] sm:$0xf]
    %v1054 = vld [vmem:[#allocation4 + $0x14] sm:$0xf]
    %v1055 = vld [vmem:[#allocation4 + $0x18] sm:$0xf]
    %v1056 = vld [vmem:[#allocation4 + $0x1c] sm:$0xf]
    %v1057 = vld [vmem:[#allocation4 + $0x20] sm:$0xf]
    %v1058 = vld [vmem:[#allocation4 + $0x24] sm:$0xf]
    %v1059 = vld [vmem:[#allocation4 + $0x28] sm:$0xf]
    %v1060 = vld [vmem:[#allocation4 + $0x2c] sm:$0xf]
    %v1061 = vld [vmem:[#allocation4 + $0x30] sm:$0xf]
    %v1062 = vld [vmem:[#allocation4 + $0x34] sm:$0xf]
    %v1063 = vld [vmem:[#allocation4 + $0x38] sm:$0xf]
    %v1064 = vld [vmem:[#allocation4 + $0x3c] sm:$0xf]
    %v1065 = vld [vmem:[%s6] sm:$0x1]
    %v1067 = vlaneseq
    %v1068 = vshrl.u32 %v1067, 7
    %v1069 = vsub.s32 0, %v1068
    %v1070 = vrot.slane %v1065, %v1069
    %v1088 = vunpack.c.l.b16 %v1049
    %v1089 = vunpack.c.l.b16 %v1050
    %v1090 = vunpack.c.l.b16 %v1051
    %v1091 = vunpack.c.l.b16 %v1052
    %v1092 = vunpack.c.l.b16 %v1053
    %v1093 = vunpack.c.l.b16 %v1054
    %v1094 = vunpack.c.l.b16 %v1055
    %v1095 = vunpack.c.l.b16 %v1056
    %v1096 = vunpack.c.l.b16 %v1057
    %v1097 = vunpack.c.l.b16 %v1058
    %v1098 = vunpack.c.l.b16 %v1059
    %v1099 = vunpack.c.l.b16 %v1060
    %v1100 = vunpack.c.l.b16 %v1061
    %v1101 = vunpack.c.l.b16 %v1062
    %v1102 = vunpack.c.l.b16 %v1063
    %v1103 = vunpack.c.l.b16 %v1064
    %v1104 = vpack.c.b16 %v1089, %v1088
    %v1105 = vpack.c.b16 %v1091, %v1090
    %v1106 = vpack.c.b16 %v1093, %v1092
    %v1107 = vpack.c.b16 %v1095, %v1094
    %v1108 = vpack.c.b16 %v1097, %v1096
    %v1109 = vpack.c.b16 %v1099, %v1098
    %v1110 = vpack.c.b16 %v1101, %v1100
    %v1111 = vpack.c.b16 %v1103, %v1102
    %1120 = vmatprep.subr.bf16.mxu0 0
    %1121 = vmatpush1.bf16.msra.mxu0 %v1104
    %1122 = vmatprep.subr.bf16.mxu0 0
    %1123 = vmatpush1.bf16.msra.mxu0 %v1105
    %1124 = vmatprep.subr.bf16.mxu0 0
    %1125 = vmatpush1.bf16.msra.mxu0 %v1106
    %1126 = vmatprep.subr.bf16.mxu0 0
    %1127 = vmatpush1.bf16.msra.mxu0 %v1107
    %1128 = vmatprep.subr.bf16.mxu0 0
    %1129 = vmatpush1.bf16.msra.mxu0 %v1108
    %1130 = vmatprep.subr.bf16.mxu0 0
    %1131 = vmatpush1.bf16.msra.mxu0 %v1109
    %1132 = vmatprep.subr.bf16.mxu0 0
    %1133 = vmatpush1.bf16.msra.mxu0 %v1110
    %1134 = vmatprep.subr.bf16.mxu0 0
    %1135 = vmatpush1.bf16.msra.mxu0 %v1111
    %1136 = vmatprep.subr.bf16.mxu0 0
    %1137 = vmatpush1.bf16.msra.mxu0 0
    %1138 = vmatprep.subr.bf16.mxu0 0
    %1139 = vmatpush1.bf16.msra.mxu0 0
    %1140 = vmatprep.subr.bf16.mxu0 0
    %1141 = vmatpush1.bf16.msra.mxu0 0
    %1142 = vmatprep.subr.bf16.mxu0 0
    %1143 = vmatpush1.bf16.msra.mxu0 0
    %1144 = vmatprep.subr.bf16.mxu0 0
    %1145 = vmatpush1.bf16.msra.mxu0 0
    %1146 = vmatprep.subr.bf16.mxu0 0
    %1147 = vmatpush1.bf16.msra.mxu0 0
    %1148 = vmatprep.subr.bf16.mxu0 0
    %1149 = vmatpush1.bf16.msra.mxu0 0
    %1150 = vmatprep.subr.bf16.mxu0 0
    %1151 = vmatpush1.bf16.msra.mxu0 0
    %1152 = vmatprep.mubr.bf16.mxu0 0
    %1153 = vmatmul.mubr.bf16.gmra.mrb[0].mxu0 %v1048
    %v1154 = vpop.f32.mrb[0].mxu0
    %v1155 = vadd.f32 %v1070, %v1154
    %v1156 = vpop.f32.mrb[0].mxu0
    %v1157 = vpop.f32.mrb[0].mxu0
    %v1158 = vadd.f32 %v1070, %v1157
    %v1159 = vpop.f32.mrb[0].mxu0
    %1160 = vdwg.mxu0
    %v1161 = vpack.c.bf16 %v1158, %v1155
    %v1163 = vunpack.c.l.b16 %v1161
    %v1164 = vunpack.c.h.b16 %v1161
    %v1165 = vpack.c.b16 %v1163, %v1163
    %v1166 = vpack.c.b16 %v1164, %v1164
    %1169 = vst [vmem:[#allocation6] sm:$0xf] %v1165
    %1170 = vst [vmem:[#allocation6 + $0x4] sm:$0xf] %v1166
    // Predicated region
    $region38: #{mlp_forward.1} parent=1 // pred_check
      _
    $region39: #{mlp_forward.1} parent=1 // pred_check_branch
      %1172 = sbr.rel (0) target = $region41
    $region40: #{mlp_forward.1} parent=1 // pred_region
      // Predicated region
      $region42: #{mlp_forward.1} parent=40 // pred_check
        _
      $region43: #{mlp_forward.1} parent=40 // pred_check_branch
        %1174 = sbr.rel (0) target = $region45
      $region44: #{mlp_forward.1} parent=40 // pred_region
        // Predicated region
        $region46: #{mlp_forward.1} parent=44 // pred_check
          _
        $region47: #{mlp_forward.1} parent=44 // pred_check_branch
          %1176 = sbr.rel target = $region49
        $region48: #{mlp_forward.1} parent=44 // pred_region
          // Predicated region
          $region61: #{mlp_forward.1} parent=48 // pred_check
            _
          $region62: #{mlp_forward.1} parent=48 // pred_check_branch
            %1191 = sbr.rel (0) target = $region64
          $region63: #{mlp_forward.1} parent=48 // pred_region
            loop: start=0, step=1, limit=1
            $region65: #{mlp_forward.1} parent=63 // loop_pre_header
              _
            $region66: #{mlp_forward.1} parent=63 // loop_header
              %s1194 = sphi 0, %s1198
              %p1195 = scmp.ge.s32.totalorder %s1194, 1
              %s1199 = sphi [#allocation6], [#allocation6]
              %s1200 = sphi %s7, %s7
            $region67: #{mlp_forward.1} parent=63 // loop_header_branch
              %1197 = sbr.rel (%p1195) target = $region71
            $region68: #{mlp_forward.1} parent=63 // loop_body
              %v1201 = vld [vmem:[%s1199] sm:$0xf]
              %1202 = vst [vmem:[%s1200] sm:$0xf] %v1201
            $region69: #{mlp_forward.1} parent=63 // loop_footer
              %s1198 = sadd.s32 1, %s1194
            $region70: #{mlp_forward.1} parent=63 // loop_footer_branch
              %1193 = sbr.rel target = $region66
            $region71: #{mlp_forward.1} parent=63 // loop_exit
              _
          $region64: #{mlp_forward.1} parent=48 // pred_fallthru
            _
        $region49: #{mlp_forward.1} parent=44 // pred_fallthru
          _
        // Predicated region
        $region50: #{mlp_forward.1} parent=44 // pred_check
          _
        $region51: #{mlp_forward.1} parent=44 // pred_check_branch
          %1178 = sbr.rel (0) target = $region53
        $region52: #{mlp_forward.1} parent=44 // pred_region
          loop: start=0, step=1, limit=1
          $region54: #{mlp_forward.1} parent=52 // loop_pre_header
            _
          $region55: #{mlp_forward.1} parent=52 // loop_header
            %s1181 = sphi 0, %s1185
            %p1182 = scmp.ge.s32.totalorder %s1181, 1
            %s1186 = sphi [#allocation6], [#allocation6]
            %s1187 = sphi %s7, %s7
          $region56: #{mlp_forward.1} parent=52 // loop_header_branch
            %1184 = sbr.rel (%p1182) target = $region60
          $region57: #{mlp_forward.1} parent=52 // loop_body
            %v1188 = vld [vmem:[%s1186] sm:$0xf]
            %1189 = vst [vmem:[%s1187] sm:$0xf] %v1188
          $region58: #{mlp_forward.1} parent=52 // loop_footer
            %s1185 = sadd.s32 1, %s1181
          $region59: #{mlp_forward.1} parent=52 // loop_footer_branch
            %1180 = sbr.rel target = $region55
          $region60: #{mlp_forward.1} parent=52 // loop_exit
            _
        $region53: #{mlp_forward.1} parent=44 // pred_fallthru
          _
      $region45: #{mlp_forward.1} parent=40 // pred_fallthru
        _
      %1203 = vnop
    $region41: #{mlp_forward.1} parent=1 // pred_fallthru
      _
    // Predicated region
    $region72: #{mlp_forward.1} parent=1 // pred_check
      _
    $region73: #{mlp_forward.1} parent=1 // pred_check_branch
      %1205 = sbr.rel (0) target = $region75
    $region74: #{mlp_forward.1} parent=1 // pred_region
      _
    $region75: #{mlp_forward.1} parent=1 // pred_fallthru
      _
    %1206 = vsyncpa [#allocation3], 1
    %1207 = vsyncpa [#allocation5], 1

</llo_original>
